<compile_context>
chip_gen: v7x
topology: tpu7x:2x2x1
jax: 0.10.0
libtpu: 0.0.40
codegen_flags: <defaults>
</compile_context>

<pallas_src>
import math

import jax
import jax.numpy as jnp
import numpy as np
from jax.experimental import pallas as pl
from jax.experimental.pallas import tpu as pltpu


def _pair(v):
    if isinstance(v, (tuple, list)):
        return tuple(v)
    return (v, v)


def _round_up(x, m):
    return ((x + m - 1) // m) * m


# ----------------------------------------------------------------------------
# Pallas kernel: out = weight[g] @ cols[n, g, :, tile] + bias[g]
# (mask modulation already folded into cols by the wrapper)
# ----------------------------------------------------------------------------
def _mdcn_kernel(cols_ref, w_ref, b_ref, o_ref):
    # cols_ref : (CgK_pad, P_TILE)  bf16   modulated, sampled columns
    # w_ref    : (Cog,     CgK_pad) bf16
    # b_ref    : (Cog,     1)       f32
    # o_ref    : (Cog,     P_TILE)  bf16 (or caller dtype)
    acc = jnp.dot(w_ref[...], cols_ref[...],
                  preferred_element_type=jnp.float32)          # MXU, f32 accumulate
    o_ref[...] = (acc + b_ref[...]).astype(o_ref.dtype)


# ----------------------------------------------------------------------------
# JAX glue: deformable bilinear im2col (mmcv dmcn_im2col_bilinear semantics)
# with the DCNv2 modulation mask folded in.  Single fused 4-corner gather.
# ----------------------------------------------------------------------------
def _deform_im2col(x, offset, mask, kernel_size, stride, padding, dilation,
                   deform_groups, compute_dtype=jnp.bfloat16):
    N, C, H, W = x.shape
    kH, kW = kernel_size
    sH, sW = stride
    pH, pW = padding
    dH, dW = dilation
    Ho = (H + 2 * pH - (dH * (kH - 1) + 1)) // sH + 1
    Wo = (W + 2 * pW - (dW * (kW - 1) + 1)) // sW + 1
    K = kH * kW
    P = Ho * Wo
    dg = deform_groups
    Cper = C // dg

    x_f = x.astype(jnp.float32)
    off = offset.reshape(N, dg, K, 2, Ho, Wo).astype(jnp.float32)

    kidx = jnp.arange(K)
    khv = (kidx // kW).astype(jnp.float32)
    kwv = (kidx % kW).astype(jnp.float32)
    ho = jnp.arange(Ho, dtype=jnp.float32)
    wo = jnp.arange(Wo, dtype=jnp.float32)

    base_py = ho[None, :, None] * sH - pH + khv[:, None, None] * dH   # (K, Ho, 1)
    base_px = wo[None, None, :] * sW - pW + kwv[:, None, None] * dW   # (K, 1, Wo)

    py = base_py[None, None] + off[:, :, :, 0]    # (N, dg, K, Ho, Wo)
    px = base_px[None, None] + off[:, :, :, 1]    # (N, dg, K, Ho, Wo)

    h_low = jnp.floor(py)
    w_low = jnp.floor(px)
    lh = py - h_low
    lw = px - w_low
    hh = 1.0 - lh
    hw = 1.0 - lw
    h_lo = h_low.astype(jnp.int32)
    w_lo = w_low.astype(jnp.int32)
    h_hi = h_lo + 1
    w_hi = w_lo + 1

    # Stack the 4 bilinear corners -> ONE gather instead of four.
    ch = jnp.stack([h_lo, h_lo, h_hi, h_hi], axis=2)        # (N, dg, 4, K, Ho, Wo)
    cw = jnp.stack([w_lo, w_hi, w_lo, w_hi], axis=2)
    cwt = jnp.stack([hh * hw, hh * lw, lh * hw, lh * lw], axis=2)

    valid = ((ch >= 0) & (ch < H) & (cw >= 0) & (cw < W)).astype(jnp.float32)
    idx = jnp.clip(ch, 0, H - 1) * W + jnp.clip(cw, 0, W - 1)     # (N, dg, 4, K, Ho, Wo)

    x_g = x_f.reshape(N, dg, Cper, H * W)
    idx_flat = jnp.broadcast_to(idx.reshape(N, dg, 1, 4 * K * P),
                                (N, dg, Cper, 4 * K * P))
    vals = jnp.take_along_axis(x_g, idx_flat, axis=3)             # one fused gather
    vals = vals.reshape(N, dg, Cper, 4, K, P)

    # Fold OOB zeroing + bilinear weights + DCNv2 modulation mask into one set
    # of per-corner weights (broadcast over Cper exactly once).
    wfull = (cwt * valid).reshape(N, dg, 1, 4, K, P)
    wfull = wfull * mask.astype(jnp.float32).reshape(N, dg, 1, 1, K, P)

    cols = jnp.sum(vals * wfull, axis=3)                          # (N, dg, Cper, K, P)
    # Cast early: all downstream passes (pad, reshape, kernel DMA) move bf16.
    cols = cols.astype(compute_dtype).reshape(N, C, K, P)
    return cols, Ho, Wo


# ----------------------------------------------------------------------------
# Generation-aware tile / VMEM sizing
# ----------------------------------------------------------------------------
def _vmem_capacity_bytes(default=128 * 1024 * 1024):
    try:
        return int(pltpu.get_tpu_info().vmem_capacity_bytes)
    except Exception:
        return default


def _choose_p_tile(cgk_pad, lanes_total, itemsize, vmem_cap_bytes):
    """Lane tile: multiple of 128; double-buffered cols block within budget."""
    if vmem_cap_bytes >= 100 * 1024 * 1024:      # v5e / v6e: 128 MiB VMEM
        budget_bytes, lane_cap = 20 * 1024 * 1024, 4096
    else:                                        # v7x: 64 MiB per TensorCore
        budget_bytes, lane_cap = 6 * 1024 * 1024, 2048
    max_lanes = budget_bytes // (2 * cgk_pad * itemsize)
    max_lanes = max(128, (max_lanes // 128) * 128)
    max_lanes = min(max_lanes, lane_cap)
    lanes_rounded = _round_up(max(lanes_total, 1), 128)
    return int(min(max_lanes, lanes_rounded))


# ----------------------------------------------------------------------------
# Full forward
# ----------------------------------------------------------------------------
def modulated_deform_conv2d(x, offset, mask, weight, bias, stride=1, padding=0,
                            dilation=1, groups=1, deform_groups=1,
                            compute_dtype=jnp.bfloat16, out_dtype=None,
                            p_tile=None):
    stride = _pair(stride)
    padding = _pair(padding)
    dilation = _pair(dilation)
    N, C, H, W = x.shape
    Cout, Cg, kH, kW = weight.shape
    K = kH * kW
    assert Cg * groups == C, "weight/in_channels/groups mismatch"
    assert Cout % groups == 0, "out_channels must be divisible by groups"
    assert C % deform_groups == 0, "in_channels must be divisible by deform_groups"
    if out_dtype is None:
        out_dtype = compute_dtype

    sH, sW = stride
    pH, pW = padding
    dH, dW = dilation
    Ho = (H + 2 * pH - (dH * (kH - 1) + 1)) // sH + 1
    Wo = (W + 2 * pW - (dW * (kW - 1) + 1)) // sW + 1
    assert offset.shape == (N, deform_groups * 2 * K, Ho, Wo), offset.shape
    assert mask.shape == (N, deform_groups * K, Ho, Wo), mask.shape

    cols, Ho, Wo = _deform_im2col(
        x, offset, mask, (kH, kW), stride, padding, dilation, deform_groups,
        compute_dtype=compute_dtype)                              # (N, C, K, P) bf16
    P = Ho * Wo
    CgK = Cg * K
    Cog = Cout // groups

    # Contraction dim padded only to bf16 sublane packing (don't inflate HBM).
    CgK_pad = _round_up(CgK, 16)

    # Natural layout (N, groups, CgK, P): pure reshape, no transpose.
    cols_g = cols.reshape(N, groups, CgK, P)

    vmem_cap = _vmem_capacity_bytes()
    c_isz = jnp.dtype(compute_dtype).itemsize
    o_isz = jnp.dtype(out_dtype).itemsize
    if p_tile is None:
        p_tile = _choose_p_tile(CgK_pad, P, c_isz, vmem_cap)
    assert p_tile % 128 == 0, "p_tile must be a multiple of 128"

    # v7x has 2 TensorCores: make sure there are >= 2 parallel grid units.
    if groups == 1 and N == 1 and _round_up(P, p_tile) // p_tile == 1 and P > 128:
        p_tile = max(128, _round_up((P + 1) // 2, 128))

    P_pad = _round_up(P, p_tile)
    n_ptiles = P_pad // p_tile

    # Pad (already bf16, so half the bytes of the old f32 pad pass).
    cols_g = jnp.pad(cols_g, ((0, 0), (0, 0), (0, CgK_pad - CgK), (0, P_pad - P)))

    w_g = weight.astype(jnp.float32).reshape(groups, Cog, CgK)
    w_g = jnp.pad(w_g, ((0, 0), (0, 0), (0, CgK_pad - CgK))).astype(compute_dtype)

    if bias is None:
        bias = jnp.zeros((Cout,), jnp.float32)
    b_g = bias.astype(jnp.float32).reshape(groups, Cog, 1)

    # VMEM footprint of the double-buffered blocks + Mosaic scratch margin.
    cols_blk = CgK_pad * p_tile * c_isz
    w_blk = Cog * CgK_pad * c_isz
    b_blk = Cog * 4
    out_blk = Cog * p_tile * o_isz
    need = 2 * (cols_blk + w_blk + b_blk + out_blk)
    vmem_limit = max(int(need * 1.5) + (4 << 20), 16 << 20)
    vmem_limit = min(vmem_limit, max(vmem_cap - (4 << 20), 16 << 20))

    flops = 2 * N * groups * Cog * CgK_pad * P_pad
    bytes_accessed = (N * groups * CgK_pad * P_pad * c_isz
                      + groups * Cog * CgK_pad * c_isz
                      + N * groups * Cog * P_pad * o_isz)
    cost = pl.CostEstimate(flops=flops, transcendentals=0,
                           bytes_accessed=bytes_accessed)

    out = pl.pallas_call(
        _mdcn_kernel,
        out_shape=jax.ShapeDtypeStruct((N, groups, Cog, P_pad), out_dtype),
        grid_spec=pltpu.PrefetchScalarGridSpec(
            num_scalar_prefetch=0,
            # g outermost: weight/bias block index constant across (n, p) steps
            # -> stays VMEM-resident; n and p both independent ("parallel").
            grid=(groups, N, n_ptiles),
            in_specs=[
                pl.BlockSpec((None, None, CgK_pad, p_tile),
                             lambda g, n, p: (n, g, 0, p)),
                pl.BlockSpec((None, Cog, CgK_pad),
                             lambda g, n, p: (g, 0, 0)),
                pl.BlockSpec((None, Cog, 1),
                             lambda g, n, p: (g, 0, 0)),
            ],
            out_specs=pl.BlockSpec((None, None, Cog, p_tile),
                                   lambda g, n, p: (n, g, 0, p)),
        ),
        compiler_params=pltpu.CompilerParams(
            dimension_semantics=("parallel", "parallel", "parallel"),
            vmem_limit_bytes=int(vmem_limit)),
        cost_estimate=cost,
    )(cols_g, w_g, b_g)

    # (N, groups, Cog, P_pad) -> (N, Cout, Ho, Wo): slice + reshape only.
    out = out[:, :, :, :P].reshape(N, Cout, Ho, Wo)
    return out


# ----------------------------------------------------------------------------
# Module-like wrapper mirroring the PyTorch ModulatedDeformConv2d
# ----------------------------------------------------------------------------
class ModulatedDeformConv2d:
    def __init__(self, in_channels, out_channels, kernel_size, stride=1,
                 padding=0, dilation=1, groups=1, deform_groups=1, bias=True,
                 key=None):
        self.in_channels = in_channels
        self.out_channels = out_channels
        self.kernel_size = _pair(kernel_size)
        self.stride = _pair(stride)
        self.padding = _pair(padding)
        self.dilation = _pair(dilation)
        self.groups = groups
        self.deform_groups = deform_groups

        if key is None:
            key = jax.random.PRNGKey(42)
        n = in_channels
        for k in self.kernel_size:
            n *= k
        stdv = 1.0 / math.sqrt(n)
        self.weight = jax.random.uniform(
            key, (out_channels, in_channels // groups, *self.kernel_size),
            minval=-stdv, maxval=stdv, dtype=jnp.float32)
        self.bias = jnp.zeros((out_channels,), jnp.float32) if bias else None

    def __call__(self, x, offset, mask):
        return modulated_deform_conv2d(
            x, offset, mask, self.weight, self.bias, self.stride, self.padding,
            self.dilation, self.groups, self.deform_groups)


# ----------------------------------------------------------------------------
# Pure-JAX reference (f32 throughout) for correctness check
# ----------------------------------------------------------------------------
def _reference_forward(module, x, offset, mask):
    kH, kW = module.kernel_size
    cols, Ho, Wo = _deform_im2col(
        x, offset, mask, (kH, kW), module.stride, module.padding,
        module.dilation, module.deform_groups, compute_dtype=jnp.float32)
    N = x.shape[0]
    groups = module.groups
    Cout = module.out_channels
    Cog = Cout // groups
    CgK = (module.in_channels // groups) * kH * kW
    P = Ho * Wo
    cols_g = cols.reshape(N, groups, CgK, P)
    w_g = module.weight.reshape(groups, Cog, CgK)
    b = module.bias if module.bias is not None else jnp.zeros((Cout,), jnp.float32)
    out = jnp.einsum("gok,ngkp->ngop", w_g, cols_g,
                     precision=jax.lax.Precision.HIGHEST) + b.reshape(groups, Cog, 1)
    return out.reshape(N, Cout, Ho, Wo)


if __name__ == "__main__":
    key = jax.random.PRNGKey(0)
    k_x, k_off, k_mask, k_w, k_b = jax.random.split(key, 5)

    N, Cin, H, W = 2, 4, 16, 16
    Cout, ks = 8, 3
    deform_groups = 1

    mod = ModulatedDeformConv2d(Cin, Cout, ks, stride=1, padding=1, dilation=1,
                                groups=1, deform_groups=deform_groups, bias=True,
                                key=k_w)
    # Non-zero bias to exercise the bias path (module default initializes zeros).
    mod.bias = 0.1 * jax.random.normal(k_b, (Cout,), jnp.float32)

    x = jax.random.normal(k_x, (N, Cin, H, W), jnp.float32)
    offset = 0.5 * jax.random.normal(
        k_off, (N, deform_groups * 2 * ks * ks, H, W), jnp.float32)
    mask = jax.nn.sigmoid(
        jax.random.normal(k_mask, (N, deform_groups * ks * ks, H, W), jnp.float32))

    out = mod(x, offset, mask)
    out = jax.block_until_ready(out)
    assert out.shape == (N, Cout, H, W), out.shape

    ref = _reference_forward(mod, x, offset, mask)
    # bf16 operands / bf16 output with f32 accumulation -> loosened tolerance.
    np.testing.assert_allclose(np.asarray(out.astype(jnp.float32)),
                               np.asarray(ref), rtol=2e-2, atol=2e-2)

    print("KERNEL_OK")
</pallas_src>

<mosaic_0001>
module attributes {stable_mosaic.version = 11 : i64} {
  func.func @_mdcn_kernel(%arg0: i32, %arg1: i32, %arg2: i32, %arg3: memref<1x1x48x256xbf16, #tpu.memory_space<vmem>>, %arg4: memref<1x8x48xbf16, #tpu.memory_space<vmem>>, %arg5: memref<1x8x1xf32, #tpu.memory_space<vmem>>, %arg6: memref<1x1x8x256xbf16, #tpu.memory_space<vmem>>) attributes {dimension_semantics = [#tpu.dimension_semantics<parallel>, #tpu.dimension_semantics<parallel>, #tpu.dimension_semantics<parallel>], iteration_bounds = array<i64: 1, 2, 1>, scalar_prefetch = 0 : i64, scratch_operands = 0 : i64, tpu.core_type = #tpu.core_type<tc>, window_params = [{transform_indices = @transform_0, window_bounds = array<i64: 1, 1, 48, 256>}, {transform_indices = @transform_1, window_bounds = array<i64: 1, 8, 48>}, {transform_indices = @transform_2, window_bounds = array<i64: 1, 8, 1>}, {transform_indices = @transform_3, window_bounds = array<i64: 1, 1, 8, 256>}]} {
    %c0 = arith.constant 0 : index
    %c0_0 = arith.constant 0 : index
    %c0_1 = arith.constant 0 : index
    %0 = vector.load %arg4[%c0, %c0_0, %c0_1] : memref<1x8x48xbf16, #tpu.memory_space<vmem>>, vector<1x8x48xbf16>
    %1 = vector.shape_cast %0 : vector<1x8x48xbf16> to vector<8x48xbf16>
    %c0_2 = arith.constant 0 : index
    %c0_3 = arith.constant 0 : index
    %c0_4 = arith.constant 0 : index
    %c0_5 = arith.constant 0 : index
    %2 = vector.load %arg3[%c0_2, %c0_3, %c0_4, %c0_5] : memref<1x1x48x256xbf16, #tpu.memory_space<vmem>>, vector<1x1x48x256xbf16>
    %3 = vector.shape_cast %2 : vector<1x1x48x256xbf16> to vector<48x256xbf16>
    %cst = arith.constant dense<0.000000e+00> : vector<8x256xf32>
    %4 = tpu.matmul %1, %3, %cst {dimension_numbers = #tpu.dot_dimension_numbers<[1], [0], [0], [1], [0, 0, 1, 1], [], []>} : vector<8x48xbf16>, vector<48x256xbf16>, vector<8x256xf32> -> vector<8x256xf32>
    %c0_6 = arith.constant 0 : index
    %c0_7 = arith.constant 0 : index
    %c0_8 = arith.constant 0 : index
    %5 = vector.load %arg5[%c0_6, %c0_7, %c0_8] : memref<1x8x1xf32, #tpu.memory_space<vmem>>, vector<1x8x1xf32>
    %6 = vector.shape_cast %5 : vector<1x8x1xf32> to vector<8x1xf32>
    %7 = vector.broadcast %6 : vector<8x1xf32> to vector<8x256xf32>
    %8 = arith.addf %4, %7 : vector<8x256xf32>
    %9 = arith.truncf %8 : vector<8x256xf32> to vector<8x256xbf16>
    %c0_9 = arith.constant 0 : index
    %c0_10 = arith.constant 0 : index
    %c0_11 = arith.constant 0 : index
    %c0_12 = arith.constant 0 : index
    %10 = vector.load %arg6[%c0_9, %c0_10, %c0_11, %c0_12] : memref<1x1x8x256xbf16, #tpu.memory_space<vmem>>, vector<1x1x8x256xbf16>
    %11 = vector.shape_cast %10 : vector<1x1x8x256xbf16> to vector<8x256xbf16>
    %12 = vector.shape_cast %9 : vector<8x256xbf16> to vector<1x1x8x256xbf16>
    tpu.vector_store %arg6[%c0_9, %c0_10, %c0_11, %c0_12], %12 {strides = array<i32>} : memref<1x1x8x256xbf16, #tpu.memory_space<vmem>>, vector<1x1x8x256xbf16>,
    return
  }
  func.func @transform_0(%arg0: i32, %arg1: i32, %arg2: i32) -> (i32, i32, i32, i32) {
    %c0_i32 = arith.constant 0 : i32
    %c0_i32_0 = arith.constant 0 : i32
    return %arg1, %arg0, %c0_i32, %arg2 : i32, i32, i32, i32
  }
  func.func @transform_1(%arg0: i32, %arg1: i32, %arg2: i32) -> (i32, i32, i32) {
    %c0_i32 = arith.constant 0 : i32
    %c0_i32_0 = arith.constant 0 : i32
    %c0_i32_1 = arith.constant 0 : i32
    return %arg0, %c0_i32, %c0_i32_0 : i32, i32, i32
  }
  func.func @transform_2(%arg0: i32, %arg1: i32, %arg2: i32) -> (i32, i32, i32) {
    %c0_i32 = arith.constant 0 : i32
    %c0_i32_0 = arith.constant 0 : i32
    %c0_i32_1 = arith.constant 0 : i32
    return %arg0, %c0_i32, %c0_i32_0 : i32, i32, i32
  }
  func.func @transform_3(%arg0: i32, %arg1: i32, %arg2: i32) -> (i32, i32, i32, i32) {
    %c0_i32 = arith.constant 0 : i32
    %c0_i32_0 = arith.constant 0 : i32
    return %arg1, %arg0, %c0_i32, %arg2 : i32, i32, i32, i32
  }
}

</mosaic_0001>

<llo_original>
// kernel: tpu_custom_call.1
$region0: #{tpu_custom_call.1}
  #allocation0 [shape = 'u32[]', space=smem, size = 0x4, offset = 0x4, fixed_abs, tag = 'smem constant byte address 0x4 - core index']
  #allocation1 [shape = 'u32[144,128]{1,0:T(1,128)}', space=vmem, size = 0x12000, scoped, tag = 'internal scratch']
  %s0 = inlined_call_operand.hbm [shape: bf16[2,1,48,256], index: 0, kind: input, shape index: {}]
  %s1 = inlined_call_operand.vmem [shape: bf16[1,8,48], index: 1, kind: input, shape index: {}]
  %s2 = inlined_call_operand.vmem [shape: f32[1,8,1], index: 2, kind: input, shape index: {}]
  %s3 = inlined_call_operand.hbm [shape: bf16[2,1,8,256], index: 3, kind: output, shape index: {}]
  %s4 = sld [smem:[#allocation0]]
  $region49: #{tpu_custom_call.1} parent=0
    _
  %s6 = ssub.s32 1, %s4
  %s7 = scalar_select 0, %s6, %s4
  $region1: #{tpu_custom_call.1} parent=0
    #allocation2 [shape = 'u8[49152]{0}', space=vmem, size = 0xc000, scoped, tag = 'input window, operand 0']
    #allocation3 [shape = 's32[2]{0}', space=sflag, size = 0x8, scoped, tag = 'scoped memory for tpu_custom_call.1']
    #allocation4 [shape = 's32[2]{0}', space=sflag, size = 0x8, scoped, tag = 'scoped memory for tpu_custom_call.1']
    #allocation5 [shape = 'u8[8192]{0}', space=vmem, size = 0x2000, scoped, tag = 'output window, operand 0']
    %8 = vsyncpa [#allocation3], 0
    %s9 = scalar_lea.sflag [#allocation3], 1
    %10 = vsyncpa %s9, 0
    %11 = vsyncpa [#allocation4], 0
    %s12 = scalar_lea.sflag [#allocation4], 1
    %13 = vsyncpa %s12, 0
    loop: start=0, step=1, limit=4
    $region2: #{tpu_custom_call.1} parent=1 // loop_pre_header
      _
    $region3: #{tpu_custom_call.1} parent=1 // loop_header
      %s15 = sphi 0, %s19
      %p16 = scmp.ge.s32.totalorder %s15, 4
      %s22 = sphi 0, %s41
      %s23 = sphi 0, %s37
      %s24 = sphi 0, %s33
      %s25 = sphi 0, %s22
      %s26 = sphi 0, %s23
      %s27 = sphi 0, %s24
      %s28 = sphi 0, %s25
      %s29 = sphi 0, %s26
      %s30 = sphi 0, %s27
      %s48 = sphi 0, %s50
      %s51 = sphi 0, %s48
      %s52 = sphi 0, %s51
      %s68 = sphi 0, %s52
      %s74 = sphi 0, %s76
      %s77 = sphi 0, %s74
      %s78 = sphi 0, %s77
      %s94 = sphi 0, %s78
      %s100 = sphi 0, %s102
      %s103 = sphi 0, %s100
      %s104 = sphi 0, %s103
      %s120 = sphi 0, %s104
      %s130 = sphi 0, %s132
      %s133 = sphi 0, %s130
      %s134 = sphi 0, %s133
      %s150 = sphi 0, %s134
    $region4: #{tpu_custom_call.1} parent=1 // loop_header_branch
      %18 = sbr.rel (%p16) target = $region8
    $region5: #{tpu_custom_call.1} parent=1 // loop_body
      %s20 = ssub.s32 %s15, 1
      %s21 = ssub.s32 %s15, 2
      %s31 = sadd.s32 1, %s24
      %p32 = scmp.ge.s32.totalorder %s31, 1
      %s33 = scalar_select %p32, 0, %s31
      %s34 = sadd.s32 1, %s23
      %s35 = scalar_select %p32, %s34, %s23
      %p36 = scmp.ge.s32.totalorder %s35, 2
      %s37 = scalar_select %p36, 0, %s35
      %s38 = sadd.s32 1, %s22
      %s39 = scalar_select %p36, %s38, %s22
      %p40 = scmp.ge.s32.totalorder %s39, 1
      %s41 = scalar_select %p40, 0, %s39
      %s42 = ssub.s32 %s23, %s37
      %s43 = ssub.s32 %s22, %s41
      %s44 = sor.u32 %s42, %s43
      %s45 = ssub.s32 %s24, %s33
      %s46 = sor.u32 %s44, %s45
      %p47 = scmp.eq.s32.totalorder %s46, 0
      %s49 = sadd.s32 %s48, 1
      %s50 = scalar_select %p47, %s48, %s49
      %p53 = pneg %p47
      %p54 = scmp.eq.s32.totalorder %s15, 1
      %p55 = por %p53, %p54
      %p56 = scmp.ne.s32.totalorder %s48, %s51
      %p57 = scmp.eq.s32.totalorder %s15, 0
      %p58 = por %p56, %p57
      %p59 = scmp.ne.s32.totalorder %s48, %s51
      %p60 = scmp.eq.s32.totalorder %s20, 1
      %p61 = por %p59, %p60
      %p62 = scmp.ne.s32.totalorder %s51, %s52
      %p63 = scmp.eq.s32.totalorder %s20, 0
      %p64 = por %p62, %p63
      %p65 = scmp.ne.s32.totalorder %s51, %s52
      %p66 = scmp.eq.s32.totalorder %s21, 1
      %p67 = por %p65, %p66
      %p69 = scmp.ne.s32.totalorder %s52, %s68
      %p70 = scmp.eq.s32.totalorder %s21, 0
      %p71 = por %p69, %p70
      %s72 = ssub.s32 %s22, %s41
      %p73 = scmp.eq.s32.totalorder %s72, 0
      %s75 = sadd.s32 %s74, 1
      %s76 = scalar_select %p73, %s74, %s75
      %p79 = pneg %p73
      %p80 = scmp.eq.s32.totalorder %s15, 1
      %p81 = por %p79, %p80
      %p82 = scmp.ne.s32.totalorder %s74, %s77
      %p83 = scmp.eq.s32.totalorder %s15, 0
      %p84 = por %p82, %p83
      %p85 = scmp.ne.s32.totalorder %s74, %s77
      %p86 = scmp.eq.s32.totalorder %s20, 1
      %p87 = por %p85, %p86
      %p88 = scmp.ne.s32.totalorder %s77, %s78
      %p89 = scmp.eq.s32.totalorder %s20, 0
      %p90 = por %p88, %p89
      %p91 = scmp.ne.s32.totalorder %s77, %s78
      %p92 = scmp.eq.s32.totalorder %s21, 1
      %p93 = por %p91, %p92
      %p95 = scmp.ne.s32.totalorder %s78, %s94
      %p96 = scmp.eq.s32.totalorder %s21, 0
      %p97 = por %p95, %p96
      %s98 = ssub.s32 %s22, %s41
      %p99 = scmp.eq.s32.totalorder %s98, 0
      %s101 = sadd.s32 %s100, 1
      %s102 = scalar_select %p99, %s100, %s101
      %p105 = pneg %p99
      %p106 = scmp.eq.s32.totalorder %s15, 1
      %p107 = por %p105, %p106
      %p108 = scmp.ne.s32.totalorder %s100, %s103
      %p109 = scmp.eq.s32.totalorder %s15, 0
      %p110 = por %p108, %p109
      %p111 = scmp.ne.s32.totalorder %s100, %s103
      %p112 = scmp.eq.s32.totalorder %s20, 1
      %p113 = por %p111, %p112
      %p114 = scmp.ne.s32.totalorder %s103, %s104
      %p115 = scmp.eq.s32.totalorder %s20, 0
      %p116 = por %p114, %p115
      %p117 = scmp.ne.s32.totalorder %s103, %s104
      %p118 = scmp.eq.s32.totalorder %s21, 1
      %p119 = por %p117, %p118
      %p121 = scmp.ne.s32.totalorder %s104, %s120
      %p122 = scmp.eq.s32.totalorder %s21, 0
      %p123 = por %p121, %p122
      %s124 = ssub.s32 %s23, %s37
      %s125 = ssub.s32 %s22, %s41
      %s126 = sor.u32 %s124, %s125
      %s127 = ssub.s32 %s24, %s33
      %s128 = sor.u32 %s126, %s127
      %p129 = scmp.eq.s32.totalorder %s128, 0
      %s131 = sadd.s32 %s130, 1
      %s132 = scalar_select %p129, %s130, %s131
      %p135 = pneg %p129
      %p136 = scmp.eq.s32.totalorder %s15, 1
      %p137 = por %p135, %p136
      %p138 = scmp.ne.s32.totalorder %s130, %s133
      %p139 = scmp.eq.s32.totalorder %s15, 0
      %p140 = por %p138, %p139
      %p141 = scmp.ne.s32.totalorder %s130, %s133
      %p142 = scmp.eq.s32.totalorder %s20, 1
      %p143 = por %p141, %p142
      %p144 = scmp.ne.s32.totalorder %s133, %s134
      %p145 = scmp.eq.s32.totalorder %s20, 0
      %p146 = por %p144, %p145
      %p147 = scmp.ne.s32.totalorder %s133, %s134
      %p148 = scmp.eq.s32.totalorder %s21, 1
      %p149 = por %p147, %p148
      %p151 = scmp.ne.s32.totalorder %s134, %s150
      %p152 = scmp.eq.s32.totalorder %s21, 0
      %p153 = por %p151, %p152
      %p154 = scmp.le.s32.totalorder 1, %s15
      %p155 = scmp.lt.s32.totalorder %s15, 3
      %p156 = pnand %p154, %p155
      %p157 = pneg %p156
      // Predicated region
      $region9: #{tpu_custom_call.1} parent=5 // pred_check
        _
      $region10: #{tpu_custom_call.1} parent=5 // pred_check_branch
        %159 = sbr.rel (%p156) target = $region12
      $region11: #{tpu_custom_call.1} parent=5 // pred_region
        %s160 = ssub.s32 %s15, 1
        // Predicated region
        $region13: #{tpu_custom_call.1} parent=11 // pred_check
          %p161 = pneg %p90
        $region14: #{tpu_custom_call.1} parent=11 // pred_check_branch
          %163 = sbr.rel (%p161) target = $region16
        $region15: #{tpu_custom_call.1} parent=11 // pred_region
          %p164 = scmp.lt.s32.totalorder %s25, 0
          %s165 = scalar_select %p164, %s25, 0
          %s166 = smul.addr %s165, 4
          %s167 = scalar_lea.vmem %s1, %s166
        $region16: #{tpu_custom_call.1} parent=11 // pred_fallthru
          _
        // Predicated region
        $region17: #{tpu_custom_call.1} parent=11 // pred_check
          %p168 = pneg %p116
        $region18: #{tpu_custom_call.1} parent=11 // pred_check_branch
          %170 = sbr.rel (%p168) target = $region20
        $region19: #{tpu_custom_call.1} parent=11 // pred_region
          %p171 = scmp.lt.s32.totalorder %s25, 0
          %s172 = scalar_select %p171, %s25, 0
          %s173 = smul.addr %s172, 8
          %s174 = scalar_lea.vmem %s2, %s173
        $region20: #{tpu_custom_call.1} parent=11 // pred_fallthru
          _
      $region12: #{tpu_custom_call.1} parent=5 // pred_fallthru
        _
      %p175 = scmp.lt.s32.totalorder %s15, 2
      // Predicated region
      $region21: #{tpu_custom_call.1} parent=5 // pred_check
        %p176 = pneg %p175
      $region22: #{tpu_custom_call.1} parent=5 // pred_check_branch
        %178 = sbr.rel (%p176) target = $region24
      $region23: #{tpu_custom_call.1} parent=5 // pred_region
        // Predicated region
        $region25: #{tpu_custom_call.1} parent=23 // pred_check
          %p179 = pneg %p58
        $region26: #{tpu_custom_call.1} parent=23 // pred_check_branch
          %181 = sbr.rel (%p179) target = $region28
        $region27: #{tpu_custom_call.1} parent=23 // pred_region
          %s182 = sand.u32 %s48, 1
          %s183 = scalar_lea.sflag [#allocation3], %s182
          %s184 = sand.u32 %s48, 1
          %s185 = smul.addr %s184, 48
          %s186 = scalar_lea.vmem [#allocation2], %s185
          %s187 = smul.u32 2, %s24
          %s189 = ssub.s32 768, 768
          %190 = vsyncadd %s183, %s189
          %s191 = smul.addr %s22, 12
          %s192 = sadd.s32 %s187, %s191
          %s193 = smul.addr %s23, 12
          %s194 = sadd.s32 %s192, %s193
          %s195 = smul.addr %s194, 64
          %s196 = scalar_lea.hbm %s0, %s195
          %s197 = sshll.u32 %s186, 4
          %s198 = int_to_ptr.vmem [resolvable:$true] %s197
          %203 = dma.hbm_to_vmem [thread:$0]  %s196, 768, %s198, %s183, 128, 128, 8
        $region28: #{tpu_custom_call.1} parent=23 // pred_fallthru
          _
      $region24: #{tpu_custom_call.1} parent=5 // pred_fallthru
        _
      %p204 = scmp.le.s32.totalorder 1, %s15
      %p205 = scmp.lt.s32.totalorder %s15, 3
      %p206 = pnand %p204, %p205
      %p207 = pneg %p206
      // Predicated region
      $region29: #{tpu_custom_call.1} parent=5 // pred_check
        _
      $region30: #{tpu_custom_call.1} parent=5 // pred_check_branch
        %209 = sbr.rel (%p206) target = $region32
      $region31: #{tpu_custom_call.1} parent=5 // pred_region
        %s210 = ssub.s32 %s15, 1
        %s211 = sand.u32 %s51, 1
        %s212 = scalar_lea.sflag [#allocation3], %s211
        %s213 = sand.u32 %s51, 1
        %s214 = smul.addr %s213, 48
        %s215 = scalar_lea.vmem [#allocation2], %s214
        // Predicated region
        $region33: #{tpu_custom_call.1} parent=31 // pred_check
          %p216 = pneg %p64
        $region34: #{tpu_custom_call.1} parent=31 // pred_check_branch
          %218 = sbr.rel (%p216) target = $region36
        $region35: #{tpu_custom_call.1} parent=31 // pred_region
          %219 = dma.done %s212, 768
        $region36: #{tpu_custom_call.1} parent=31 // pred_fallthru
          _
        %s220 = sand.u32 %s51, 1
        %s221 = scalar_lea.sflag [#allocation3], %s220
        %s222 = sand.u32 %s51, 1
        %s223 = smul.addr %s222, 48
        %s224 = scalar_lea.vmem [#allocation2], %s223
        %p225 = pneg %p64
        %p226 = pneg %p61
        %p227 = scmp.lt.s32.totalorder %s25, 0
        %s228 = scalar_select %p227, %s25, 0
        %s229 = smul.addr %s228, 4
        %s230 = scalar_lea.vmem %s1, %s229
        %p231 = pneg %p90
        %p232 = pneg %p87
        %p233 = scmp.lt.s32.totalorder %s25, 0
        %s234 = scalar_select %p233, %s25, 0
        %s235 = smul.addr %s234, 8
        %s236 = scalar_lea.vmem %s2, %s235
        %p237 = pneg %p116
        %p238 = pneg %p113
        %p239 = pneg %p146
        %p240 = pneg %p143
        %s241 = sand.u32 %s133, 1
        %s242 = scalar_lea.sflag [#allocation4], %s241
        %s243 = sand.u32 %s133, 1
        %s244 = smul.addr %s243, 8
        %s245 = scalar_lea.vmem [#allocation5], %s244
        %s246 = smul.u32 2, %s27
        %p247 = scmp.lt.s32.totalorder %s25, 0
        %s248 = scalar_select %p247, %s25, 0
        %s249 = smul.addr %s248, 4
        %s250 = scalar_lea.vmem %s1, %s249
        %p251 = scmp.lt.s32.totalorder %s25, 0
        %s252 = scalar_select %p251, %s25, 0
        %s253 = smul.addr %s252, 8
        %s254 = scalar_lea.vmem %s2, %s253
        %s255 = smul.u32 2, %s27
        %v257 = vld [vmem:[%s250] sm:$0xf]
        %v258 = vld [vmem:[%s215] sm:$0xff]
        %v259 = vld [vmem:[%s215 + $0x8] sm:$0xff]
        %v260 = vld [vmem:[%s215 + $0x10] sm:$0xff]
        %v261 = vld [vmem:[%s215 + $0x18] sm:$0xff]
        %v262 = vld [vmem:[%s215 + $0x20] sm:$0xff]
        %v263 = vld [vmem:[%s215 + $0x28] sm:$0xff]
        %v264 = vld [vmem:[%s254] sm:$0xff]
        %266 = vset.pattern.permute.xlu0 0
        %267 = vperm.xlu0 %266, %v264
        %v268 = vpop.permute.xlu0 %267
        %v276 = vunpack.c.l.b16 %v258
        %v277 = vunpack.c.h.b16 %v258
        %v278 = vunpack.c.l.b16 %v259
        %v279 = vunpack.c.h.b16 %v259
        %v280 = vunpack.c.l.b16 %v260
        %v281 = vunpack.c.h.b16 %v260
        %v282 = vunpack.c.l.b16 %v261
        %v283 = vunpack.c.h.b16 %v261
        %v284 = vunpack.c.l.b16 %v262
        %v285 = vunpack.c.h.b16 %v262
        %v286 = vunpack.c.l.b16 %v263
        %v287 = vunpack.c.h.b16 %v263
        %v288 = vpack.c.b16 %v278, %v276
        %v289 = vpack.c.b16 %v279, %v277
        %v290 = vpack.c.b16 %v282, %v280
        %v291 = vpack.c.b16 %v283, %v281
        %v292 = vpack.c.b16 %v286, %v284
        %v293 = vpack.c.b16 %v287, %v285
        %vm300 = vcmask 392192
        %v302 = vsel %vm300, %v257, 0
        %304 = vmatprep.subr.bf16.mxu0 %v289
        %305 = vmatpush1.bf16.msra.mxu0 %v288
        %306 = vmatprep.subr.bf16.mxu0 %v291
        %307 = vmatpush1.bf16.msra.mxu0 %v290
        %308 = vmatprep.subr.bf16.mxu0 %v293
        %309 = vmatpush1.bf16.msra.mxu0 %v292
        %310 = vmatprep.subr.bf16.mxu0 0
        %311 = vmatpush1.bf16.msra.mxu0 0
        %312 = vmatprep.subr.bf16.mxu0 0
        %313 = vmatpush1.bf16.msra.mxu0 0
        %314 = vmatprep.subr.bf16.mxu0 0
        %315 = vmatpush1.bf16.msra.mxu0 0
        %316 = vmatprep.subr.bf16.mxu0 0
        %317 = vmatpush1.bf16.msra.mxu0 0
        %318 = vmatprep.subr.bf16.mxu0 0
        %319 = vmatpush1.bf16.msra.mxu0 0
        %320 = vmatprep.subr.bf16.mxu0 0
        %321 = vmatpush1.bf16.msra.mxu0 0
        %322 = vmatprep.subr.bf16.mxu0 0
        %323 = vmatpush1.bf16.msra.mxu0 0
        %324 = vmatprep.subr.bf16.mxu0 0
        %325 = vmatpush1.bf16.msra.mxu0 0
        %326 = vmatprep.subr.bf16.mxu0 0
        %327 = vmatpush1.bf16.msra.mxu0 0
        %328 = vmatprep.subr.bf16.mxu0 0
        %329 = vmatpush1.bf16.msra.mxu0 0
        %330 = vmatprep.subr.bf16.mxu0 0
        %331 = vmatpush1.bf16.msra.mxu0 0
        %332 = vmatprep.subr.bf16.mxu0 0
        %333 = vmatpush1.bf16.msra.mxu0 0
        %334 = vmatprep.subr.bf16.mxu0 0
        %335 = vmatpush1.bf16.msra.mxu0 0
        %336 = vmatprep.mubr.bf16.mxu0 0
        %337 = vmatmul.mubr.bf16.gmra.mrb[0].mxu0 %v302
        %v338 = vpop.f32.mrb[0].mxu0
        %v339 = vadd.f32 %v268, %v338
        %v340 = vpop.f32.mrb[0].mxu0
        %v341 = vadd.f32 %v268, %v340
        %v342 = vpop.f32.mrb[0].mxu0
        %v343 = vpop.f32.mrb[0].mxu0
        %344 = vdwg.mxu0
        %v345 = vpack.c.bf16 %v339, %v339
        %v346 = vpack.c.bf16 %v341, %v341
        %v349 = vunpack.c.l.b16 %v345
        %v350 = vunpack.c.l.b16 %v346
        %v351 = vpack.c.b16 %v350, %v349
        %353 = vst [vmem:[%s245] sm:$0xff] %v351
        %s354 = sand.u32 %s133, 1
        %s355 = scalar_lea.sflag [#allocation4], %s354
        %s356 = sand.u32 %s133, 1
        %s357 = smul.addr %s356, 8
        %s358 = scalar_lea.vmem [#allocation5], %s357
        // Predicated region
        $region37: #{tpu_custom_call.1} parent=31 // pred_check
          %p359 = pneg %p143
        $region38: #{tpu_custom_call.1} parent=31 // pred_check_branch
          %361 = sbr.rel (%p359) target = $region40
        $region39: #{tpu_custom_call.1} parent=31 // pred_region
          %s362 = smul.u32 2, %s27
          %s364 = ssub.s32 128, 128
          %365 = vsyncadd %s355, %s364
          %s366 = smul.addr %s25, 2
          %s367 = sadd.s32 %s362, %s366
          %s368 = smul.addr %s26, 2
          %s369 = sadd.s32 %s367, %s368
          %s370 = smul.addr %s369, 64
          %s371 = scalar_lea.hbm %s3, %s370
          %s373 = sshll.u32 %s358, 4
          %s374 = int_to_ptr.vmem [resolvable:$true] %s373
          %376 = dma.vmem_to_hbm [thread:$0]  %s374, 128, %s371, %s355
        $region40: #{tpu_custom_call.1} parent=31 // pred_fallthru
          _
      $region32: #{tpu_custom_call.1} parent=5 // pred_fallthru
        _
      %p377 = scmp.le.s32.totalorder 2, %s15
      // Predicated region
      $region41: #{tpu_custom_call.1} parent=5 // pred_check
        %p378 = pneg %p377
      $region42: #{tpu_custom_call.1} parent=5 // pred_check_branch
        %380 = sbr.rel (%p378) target = $region44
      $region43: #{tpu_custom_call.1} parent=5 // pred_region
        %s381 = ssub.s32 %s15, 2
        // Predicated region
        $region45: #{tpu_custom_call.1} parent=43 // pred_check
          %p382 = pneg %p149
        $region46: #{tpu_custom_call.1} parent=43 // pred_check_branch
          %384 = sbr.rel (%p382) target = $region48
        $region47: #{tpu_custom_call.1} parent=43 // pred_region
          %s385 = sand.u32 %s134, 1
          %s386 = scalar_lea.sflag [#allocation4], %s385
          %s387 = sand.u32 %s134, 1
          %s388 = smul.addr %s387, 8
          %s389 = scalar_lea.vmem [#allocation5], %s388
          %390 = dma.done %s386, 128
        $region48: #{tpu_custom_call.1} parent=43 // pred_fallthru
          _
      $region44: #{tpu_custom_call.1} parent=5 // pred_fallthru
        _
    $region6: #{tpu_custom_call.1} parent=1 // loop_footer
      %s19 = sadd.s32 1, %s15
    $region7: #{tpu_custom_call.1} parent=1 // loop_footer_branch
      %14 = sbr.rel target = $region3
    $region8: #{tpu_custom_call.1} parent=1 // loop_exit
      _
    %391 = vsyncpa [#allocation3], 1
    %s392 = scalar_lea.sflag [#allocation3], 1
    %393 = vsyncpa %s392, 1
    %394 = vsyncpa [#allocation4], 1
    %s395 = scalar_lea.sflag [#allocation4], 1
    %396 = vsyncpa %s395, 1

</llo_original>
